<compile_context>
chip_gen: v7x
topology: tpu7x:2x2x1
jax: 0.10.0
libtpu: 0.0.40
codegen_flags: <defaults>
</compile_context>

<pallas_src>
import jax
import jax.numpy as jnp
from jax.experimental import pallas as pl
from jax.experimental.pallas import tpu as pltpu

# ----------------------------- configuration -------------------------------
B = 1              # batch size (must be 1, asserted in the wrapper)
N = 8              # args.nagents
NUM_INPUTS = 16    # observation dim per agent
HID = 32           # args.hid_size
COMM_DIM = HID     # args.comm_dim (== hid_size when not using protos)
NUM_ACTIONS = 5    # args.num_actions[0]
COMM_PASSES = 2    # args.comm_passes

LANES = 128        # 4*HID == 128 == one f32 vreg lane width

# ---- weight-slab row layout (single packed (ROWS_TOTAL, 128) f32 array) ----
R_W0 = 0                                   # first-step fused weight (NUM_INPUTS+HID, 128)
R_WC = R_W0 + NUM_INPUTS + HID             # per-pass fused weights  (2*HID, 128) each
R_HEADS = R_WC + COMM_PASSES * 2 * HID     # fused action|value head (HID, 128)
R_BIAS = R_HEADS + HID                     # bias rows: b0, b_comm[p]..., b_heads
_N_BIAS = 2 + COMM_PASSES
_BIAS_ROWS = ((_N_BIAS + 7) // 8) * 8
R_MASK = R_BIAS + _BIAS_ROWS               # effective comm mask (N rows, lanes 0:N)
ROWS_TOTAL = R_MASK + N                    # = 224 for this config

# ---- activation-slab lane layout (input, (N, 128)) ----
A_X = 0
A_H = NUM_INPUTS
A_C = NUM_INPUTS + HID

# ---- output-slab lane layout ((N, 128)) ----
O_H = 0
O_C = HID
O_A = 2 * HID
O_V = 2 * HID + NUM_ACTIONS
OUT_USED = 2 * HID + NUM_ACTIONS + 1       # 70 used lanes, rest zero padding


# ------------------------------- kernel ------------------------------------
def commnet_kernel(w_ref, act_ref, out_ref):
    f32 = jnp.float32

    h = act_ref[:, A_H:A_H + HID]
    c = act_ref[:, A_C:A_C + HID]

    def lstm_from_gates(gates, c_prev):
        # gates is exactly one (N, 128) f32 vreg; run sigmoid/tanh full-width
        # on the EUP, then take the 32-lane chunks (PyTorch order: i, f, g, o).
        sg = jax.nn.sigmoid(gates)
        th = jnp.tanh(gates)
        i_g = sg[:, 0 * HID:1 * HID]
        f_g = sg[:, 1 * HID:2 * HID]
        g_g = th[:, 2 * HID:3 * HID]
        o_g = sg[:, 3 * HID:4 * HID]
        c_new = f_g * c_prev + i_g * g_g
        h_new = o_g * jnp.tanh(c_new)
        return h_new, c_new

    # --- first LSTM step, encoder folded in ---------------------------------
    # [x | h0] is contiguous in the activation slab -> no concat needed.
    cat0 = act_ref[:, A_X:A_X + NUM_INPUTS + HID]                 # (N, 48)
    w0 = w_ref[R_W0:R_W0 + NUM_INPUTS + HID, :]                   # (48, 128)
    b0 = w_ref[R_BIAS:R_BIAS + 1, :]                              # (1, 128)
    gates = jnp.dot(cat0, w0, preferred_element_type=f32) + b0
    h, c = lstm_from_gates(gates, c)

    # --- communication passes (C-module folded into gate projection) --------
    eff_t = w_ref[R_MASK:R_MASK + N, 0:N]                         # (N, N)
    for p in range(COMM_PASSES):
        comm_sum = jnp.dot(eff_t, h, preferred_element_type=f32)  # (N, HID)
        cat = jnp.concatenate([h, comm_sum], axis=1)              # (N, 2*HID)
        wp = w_ref[R_WC + p * 2 * HID:R_WC + (p + 1) * 2 * HID, :]
        bp = w_ref[R_BIAS + 1 + p:R_BIAS + 2 + p, :]
        gates = jnp.dot(cat, wp, preferred_element_type=f32) + bp
        h, c = lstm_from_gates(gates, c)

    # --- fused action | value head -------------------------------------------
    w_heads = w_ref[R_HEADS:R_HEADS + HID, :]                     # (HID, 128)
    b_heads = w_ref[R_BIAS + 1 + COMM_PASSES:R_BIAS + 2 + COMM_PASSES, :]
    heads = jnp.dot(h, w_heads, preferred_element_type=f32) + b_heads   # (N, 128)
    logits = heads[:, 0:NUM_ACTIONS]
    val = heads[:, NUM_ACTIONS:NUM_ACTIONS + 1]
    m = jnp.max(logits, axis=-1, keepdims=True)
    z = logits - m
    logp = z - jnp.log(jnp.sum(jnp.exp(z), axis=-1, keepdims=True))

    # --- single lane-dense (N, 128) output store ------------------------------
    pad = jnp.zeros((N, LANES - OUT_USED), f32)
    out_ref[...] = jnp.concatenate([h, c, logp, val, pad], axis=1)


# ------------------------------- wrapper ------------------------------------
_COST = pl.CostEstimate(
    flops=2 * N * ((NUM_INPUTS + HID) * 4 * HID
                   + COMM_PASSES * (N * HID + 2 * HID * 4 * HID)
                   + HID * LANES),
    transcendentals=(1 + COMM_PASSES) * N * (2 * 4 * HID + HID)
                    + N * (NUM_ACTIONS + 1),
    bytes_accessed=4 * (ROWS_TOTAL * LANES + 2 * N * LANES),
)


def commnet_forward(weight_slab, x, h0, c0):
    assert B == 1 and x.shape == (B, N, NUM_INPUTS)
    assert weight_slab.shape == (ROWS_TOTAL, LANES)

    # pack (x, h0, c0) into one (N, 128) activation slab
    act = jnp.zeros((N, LANES), jnp.float32)
    act = act.at[:, A_X:A_X + NUM_INPUTS].set(x.reshape(B * N, NUM_INPUTS))
    act = act.at[:, A_H:A_H + HID].set(h0)
    act = act.at[:, A_C:A_C + HID].set(c0)

    vmem = lambda: pl.BlockSpec(memory_space=pltpu.MemorySpace.VMEM)
    out = pl.pallas_call(
        commnet_kernel,
        out_shape=jax.ShapeDtypeStruct((N, LANES), jnp.float32),
        in_specs=[vmem(), vmem()],
        out_specs=vmem(),
        cost_estimate=_COST,
    )(weight_slab, act)

    h_out = out[:, O_H:O_H + HID]
    c_out = out[:, O_C:O_C + HID]
    logp = out[:, O_A:O_A + NUM_ACTIONS]
    val = out[:, O_V:O_V + 1]
    return logp.reshape(B, N, NUM_ACTIONS), val, (h_out, c_out)


# ------------------------ deterministic parameters ---------------------------
def init_params(key):
    keys = jax.random.split(key, 8 + COMM_PASSES)

    def xavier(k, shape):  # torch Linear weight layout: (out, in)
        fan_out, fan_in = shape
        lim = (6.0 / (fan_in + fan_out)) ** 0.5
        return jax.random.uniform(k, shape, jnp.float32, -lim, lim)

    def lstm_uniform(k, shape):
        lim = 1.0 / (HID ** 0.5)
        return jax.random.uniform(k, shape, jnp.float32, -lim, lim)

    w_enc = xavier(keys[0], (COMM_DIM, NUM_INPUTS))
    w_ih = lstm_uniform(keys[1], (4 * HID, COMM_DIM))
    w_hh = lstm_uniform(keys[2], (4 * HID, HID))
    b_ih = lstm_uniform(keys[3], (1, 4 * HID))
    b_hh = lstm_uniform(keys[4], (1, 4 * HID))
    w_c = jnp.stack([xavier(keys[8 + p], (COMM_DIM, COMM_DIM)) for p in range(COMM_PASSES)])
    w_v = xavier(keys[5], (1, HID))
    w_a = xavier(keys[6], (NUM_ACTIONS, HID))

    comm_mask = jnp.ones((N, N), jnp.float32) - jnp.eye(N, dtype=jnp.float32)
    gate = jnp.ones((N,), jnp.float32)  # alive_mask * comm_action (comm_action_one=True)

    return dict(
        w_enc_t=w_enc.T,
        b_enc=jnp.full((1, COMM_DIM), 0.01, jnp.float32),     # init_weights: bias = 0.01
        w_ih_t=w_ih.T, w_hh_t=w_hh.T, b_ih=b_ih, b_hh=b_hh,
        comm_mask_t=comm_mask.T,
        gate_row=gate.reshape(1, N),
        gate_col=gate.reshape(N, 1),
        w_c_t=jnp.transpose(w_c, (0, 2, 1)),
        b_c=jnp.full((COMM_PASSES, 1, COMM_DIM), 0.01, jnp.float32),
        w_v_t=w_v.T, b_v=jnp.full((1, 1), 0.01, jnp.float32),
        w_a_t=w_a.T, b_a=jnp.full((1, NUM_ACTIONS), 0.01, jnp.float32),
    )


def pack_params(p):
    """Exact wrapper-side weight fusion + packing into one (ROWS_TOTAL, 128) slab."""
    f32 = jnp.float32
    w_ih_t, w_hh_t = p["w_ih_t"], p["w_hh_t"]

    # encoder folded into the first LSTM input projection
    w_x = p["w_enc_t"] @ w_ih_t                                    # (NUM_INPUTS, 4*HID)
    w0 = jnp.concatenate([w_x, w_hh_t], axis=0)                    # (NUM_INPUTS+HID, 4*HID)
    b0 = p["b_enc"] @ w_ih_t + p["b_ih"] + p["b_hh"]               # (1, 4*HID)

    # C module folded into the per-pass gate projection
    w_h = w_ih_t + w_hh_t                                          # input (h+cc) and hidden (h) share h
    w_comm, b_comm = [], []
    for q in range(COMM_PASSES):
        w_comm.append(jnp.concatenate([w_h, p["w_c_t"][q] @ w_ih_t], axis=0))   # (2*HID, 4*HID)
        b_comm.append(p["b_c"][q] @ w_ih_t + p["b_ih"] + p["b_hh"])             # (1, 4*HID)

    # fused action | value head (lanes [0:NUM_ACTIONS]=action, [NUM_ACTIONS]=value)
    w_heads = jnp.zeros((HID, LANES), f32)
    w_heads = w_heads.at[:, :NUM_ACTIONS].set(p["w_a_t"])
    w_heads = w_heads.at[:, NUM_ACTIONS:NUM_ACTIONS + 1].set(p["w_v_t"])
    b_heads = jnp.zeros((1, LANES), f32)
    b_heads = b_heads.at[:, :NUM_ACTIONS].set(p["b_a"])
    b_heads = b_heads.at[:, NUM_ACTIONS:NUM_ACTIONS + 1].set(p["b_v"])

    # precomputed effective comm mask, padded to full lane width
    eff_t = p["comm_mask_t"] * p["gate_row"] * p["gate_col"]       # (N, N)
    eff_pad = jnp.zeros((N, LANES), f32).at[:, :N].set(eff_t)

    bias_rows = jnp.concatenate([b0] + b_comm + [b_heads], axis=0)  # (_N_BIAS, 128)
    bias_block = jnp.zeros((_BIAS_ROWS, LANES), f32).at[:_N_BIAS, :].set(bias_rows)

    slab = jnp.concatenate([w0] + w_comm + [w_heads, bias_block, eff_pad], axis=0)
    assert slab.shape == (ROWS_TOTAL, LANES)
    return slab


# ---------------------------- pure-JAX reference -----------------------------
def reference_forward(params, x, h0, c0):
    """Faithful (unfused) reference matching the PyTorch forward path."""
    x2 = x.reshape(B * N, NUM_INPUTS)
    x_enc = x2 @ params["w_enc_t"] + params["b_enc"]

    def cell(inp, h, c):
        g = inp @ params["w_ih_t"] + params["b_ih"] + h @ params["w_hh_t"] + params["b_hh"]
        i, f, gg, o = jnp.split(g, 4, axis=-1)
        c_new = jax.nn.sigmoid(f) * c + jax.nn.sigmoid(i) * jnp.tanh(gg)
        return jax.nn.sigmoid(o) * jnp.tanh(c_new), c_new

    h, c = cell(x_enc, h0, c0)
    eff_t = params["comm_mask_t"] * params["gate_row"] * params["gate_col"]
    for p in range(COMM_PASSES):
        cc = (eff_t @ h) @ params["w_c_t"][p] + params["b_c"][p]
        h, c = cell(h + cc, h, c)
    val = h @ params["w_v_t"] + params["b_v"]
    act = jax.nn.log_softmax(h @ params["w_a_t"] + params["b_a"], axis=-1)
    return act.reshape(B, N, NUM_ACTIONS), val, (h, c)


# --------------------------------- main --------------------------------------
if __name__ == "__main__":
    key = jax.random.PRNGKey(0)
    k_param, k_x = jax.random.split(key)
    params = init_params(k_param)
    slab = pack_params(params)

    x = jax.random.normal(k_x, (B, N, NUM_INPUTS), jnp.float32)
    h0 = jnp.zeros((B * N, HID), jnp.float32)   # init_hidden -> zeros
    c0 = jnp.zeros((B * N, HID), jnp.float32)

    action, value, (h_out, c_out) = commnet_forward(slab, x, h0, c0)
    jax.block_until_ready((action, value, h_out, c_out))

    # sanity check against the faithful pure-JAX reference
    a_ref, v_ref, (h_ref, c_ref) = reference_forward(params, x, h0, c0)
    assert jnp.all(jnp.isfinite(action)) and jnp.all(jnp.isfinite(value))
    assert jnp.allclose(action, a_ref, atol=1e-2, rtol=1e-2)
    assert jnp.allclose(value, v_ref, atol=1e-2, rtol=1e-2)
    assert jnp.allclose(h_out, h_ref, atol=1e-2, rtol=1e-2)
    assert jnp.allclose(c_out, c_ref, atol=1e-2, rtol=1e-2)

    print("KERNEL_OK")
</pallas_src>

<mosaic_0001>
module attributes {stable_mosaic.version = 11 : i64} {
  func.func @commnet_kernel(%arg0: memref<224x128xf32, #tpu.memory_space<vmem>>, %arg1: memref<8x128xf32, #tpu.memory_space<vmem>>, %arg2: memref<8x128xf32, #tpu.memory_space<vmem>>) attributes {dimension_semantics = [], scalar_prefetch = 0 : i64, scratch_operands = 0 : i64, tpu.core_type = #tpu.core_type<tc>} {
    %c0 = arith.constant 0 : index
    %c48 = arith.constant 48 : index
    %0 = vector.load %arg1[%c0, %c48] : memref<8x128xf32, #tpu.memory_space<vmem>>, vector<8x32xf32>
    %c0_0 = arith.constant 0 : index
    %c0_1 = arith.constant 0 : index
    %1 = vector.load %arg1[%c0_0, %c0_1] : memref<8x128xf32, #tpu.memory_space<vmem>>, vector<8x48xf32>
    %c0_2 = arith.constant 0 : index
    %c0_3 = arith.constant 0 : index
    %2 = vector.load %arg0[%c0_2, %c0_3] : memref<224x128xf32, #tpu.memory_space<vmem>>, vector<48x128xf32>
    %c208 = arith.constant 208 : index
    %c0_4 = arith.constant 0 : index
    %3 = vector.load %arg0[%c208, %c0_4] : memref<224x128xf32, #tpu.memory_space<vmem>>, vector<1x128xf32>
    %cst = arith.constant dense<0.000000e+00> : vector<8x128xf32>
    %4 = tpu.matmul %1, %2, %cst {dimension_numbers = #tpu.dot_dimension_numbers<[1], [0], [0], [1], [0, 0, 1, 1], [], []>} : vector<8x48xf32>, vector<48x128xf32>, vector<8x128xf32> -> vector<8x128xf32>
    %5 = vector.broadcast %3 : vector<1x128xf32> to vector<8x128xf32>
    %6 = arith.addf %4, %5 : vector<8x128xf32>
    %7 = arith.negf %6 : vector<8x128xf32>
    %8 = math.exp %7 : vector<8x128xf32>
    %cst_5 = arith.constant 1.000000e+00 : f32
    %9 = vector.broadcast %cst_5 : f32 to vector<8x128xf32>
    %10 = arith.addf %9, %8 : vector<8x128xf32>
    %11 = arith.divf %9, %10 : vector<8x128xf32>
    %12 = math.tanh %6 : vector<8x128xf32>
    %13 = vector.extract_strided_slice %11 {offsets = [0, 0], sizes = [8, 32], strides = [1, 1]} : vector<8x128xf32> to vector<8x32xf32>
    %14 = vector.extract_strided_slice %11 {offsets = [0, 32], sizes = [8, 32], strides = [1, 1]} : vector<8x128xf32> to vector<8x32xf32>
    %15 = vector.extract_strided_slice %12 {offsets = [0, 64], sizes = [8, 32], strides = [1, 1]} : vector<8x128xf32> to vector<8x32xf32>
    %16 = vector.extract_strided_slice %11 {offsets = [0, 96], sizes = [8, 32], strides = [1, 1]} : vector<8x128xf32> to vector<8x32xf32>
    %17 = arith.mulf %14, %0 : vector<8x32xf32>
    %18 = arith.mulf %13, %15 : vector<8x32xf32>
    %19 = arith.addf %17, %18 : vector<8x32xf32>
    %20 = math.tanh %19 : vector<8x32xf32>
    %21 = arith.mulf %16, %20 : vector<8x32xf32>
    %c216 = arith.constant 216 : index
    %c0_6 = arith.constant 0 : index
    %22 = vector.load %arg0[%c216, %c0_6] : memref<224x128xf32, #tpu.memory_space<vmem>>, vector<8x8xf32>
    %cst_7 = arith.constant dense<0.000000e+00> : vector<8x32xf32>
    %23 = tpu.matmul %22, %21, %cst_7 {dimension_numbers = #tpu.dot_dimension_numbers<[1], [0], [0], [1], [0, 0, 1, 1], [], []>} : vector<8x8xf32>, vector<8x32xf32>, vector<8x32xf32> -> vector<8x32xf32>
    %24 = tpu.concatenate %21, %23 in 1 : vector<8x32xf32>, vector<8x32xf32> -> vector<8x64xf32>
    %c48_8 = arith.constant 48 : index
    %c0_9 = arith.constant 0 : index
    %25 = vector.load %arg0[%c48_8, %c0_9] : memref<224x128xf32, #tpu.memory_space<vmem>>, vector<64x128xf32>
    %c209 = arith.constant 209 : index
    %c0_10 = arith.constant 0 : index
    %26 = vector.load %arg0[%c209, %c0_10] : memref<224x128xf32, #tpu.memory_space<vmem>>, vector<1x128xf32>
    %cst_11 = arith.constant dense<0.000000e+00> : vector<8x128xf32>
    %27 = tpu.matmul %24, %25, %cst_11 {dimension_numbers = #tpu.dot_dimension_numbers<[1], [0], [0], [1], [0, 0, 1, 1], [], []>} : vector<8x64xf32>, vector<64x128xf32>, vector<8x128xf32> -> vector<8x128xf32>
    %28 = vector.broadcast %26 : vector<1x128xf32> to vector<8x128xf32>
    %29 = arith.addf %27, %28 : vector<8x128xf32>
    %30 = arith.negf %29 : vector<8x128xf32>
    %31 = math.exp %30 : vector<8x128xf32>
    %cst_12 = arith.constant 1.000000e+00 : f32
    %32 = vector.broadcast %cst_12 : f32 to vector<8x128xf32>
    %33 = arith.addf %32, %31 : vector<8x128xf32>
    %34 = arith.divf %32, %33 : vector<8x128xf32>
    %35 = math.tanh %29 : vector<8x128xf32>
    %36 = vector.extract_strided_slice %34 {offsets = [0, 0], sizes = [8, 32], strides = [1, 1]} : vector<8x128xf32> to vector<8x32xf32>
    %37 = vector.extract_strided_slice %34 {offsets = [0, 32], sizes = [8, 32], strides = [1, 1]} : vector<8x128xf32> to vector<8x32xf32>
    %38 = vector.extract_strided_slice %35 {offsets = [0, 64], sizes = [8, 32], strides = [1, 1]} : vector<8x128xf32> to vector<8x32xf32>
    %39 = vector.extract_strided_slice %34 {offsets = [0, 96], sizes = [8, 32], strides = [1, 1]} : vector<8x128xf32> to vector<8x32xf32>
    %40 = arith.mulf %37, %19 : vector<8x32xf32>
    %41 = arith.mulf %36, %38 : vector<8x32xf32>
    %42 = arith.addf %40, %41 : vector<8x32xf32>
    %43 = math.tanh %42 : vector<8x32xf32>
    %44 = arith.mulf %39, %43 : vector<8x32xf32>
    %cst_13 = arith.constant dense<0.000000e+00> : vector<8x32xf32>
    %45 = tpu.matmul %22, %44, %cst_13 {dimension_numbers = #tpu.dot_dimension_numbers<[1], [0], [0], [1], [0, 0, 1, 1], [], []>} : vector<8x8xf32>, vector<8x32xf32>, vector<8x32xf32> -> vector<8x32xf32>
    %46 = tpu.concatenate %44, %45 in 1 : vector<8x32xf32>, vector<8x32xf32> -> vector<8x64xf32>
    %c112 = arith.constant 112 : index
    %c0_14 = arith.constant 0 : index
    %47 = vector.load %arg0[%c112, %c0_14] : memref<224x128xf32, #tpu.memory_space<vmem>>, vector<64x128xf32>
    %c210 = arith.constant 210 : index
    %c0_15 = arith.constant 0 : index
    %48 = vector.load %arg0[%c210, %c0_15] : memref<224x128xf32, #tpu.memory_space<vmem>>, vector<1x128xf32>
    %cst_16 = arith.constant dense<0.000000e+00> : vector<8x128xf32>
    %49 = tpu.matmul %46, %47, %cst_16 {dimension_numbers = #tpu.dot_dimension_numbers<[1], [0], [0], [1], [0, 0, 1, 1], [], []>} : vector<8x64xf32>, vector<64x128xf32>, vector<8x128xf32> -> vector<8x128xf32>
    %50 = vector.broadcast %48 : vector<1x128xf32> to vector<8x128xf32>
    %51 = arith.addf %49, %50 : vector<8x128xf32>
    %52 = arith.negf %51 : vector<8x128xf32>
    %53 = math.exp %52 : vector<8x128xf32>
    %cst_17 = arith.constant 1.000000e+00 : f32
    %54 = vector.broadcast %cst_17 : f32 to vector<8x128xf32>
    %55 = arith.addf %54, %53 : vector<8x128xf32>
    %56 = arith.divf %54, %55 : vector<8x128xf32>
    %57 = math.tanh %51 : vector<8x128xf32>
    %58 = vector.extract_strided_slice %56 {offsets = [0, 0], sizes = [8, 32], strides = [1, 1]} : vector<8x128xf32> to vector<8x32xf32>
    %59 = vector.extract_strided_slice %56 {offsets = [0, 32], sizes = [8, 32], strides = [1, 1]} : vector<8x128xf32> to vector<8x32xf32>
    %60 = vector.extract_strided_slice %57 {offsets = [0, 64], sizes = [8, 32], strides = [1, 1]} : vector<8x128xf32> to vector<8x32xf32>
    %61 = vector.extract_strided_slice %56 {offsets = [0, 96], sizes = [8, 32], strides = [1, 1]} : vector<8x128xf32> to vector<8x32xf32>
    %62 = arith.mulf %59, %42 : vector<8x32xf32>
    %63 = arith.mulf %58, %60 : vector<8x32xf32>
    %64 = arith.addf %62, %63 : vector<8x32xf32>
    %65 = math.tanh %64 : vector<8x32xf32>
    %66 = arith.mulf %61, %65 : vector<8x32xf32>
    %c176 = arith.constant 176 : index
    %c0_18 = arith.constant 0 : index
    %67 = vector.load %arg0[%c176, %c0_18] : memref<224x128xf32, #tpu.memory_space<vmem>>, vector<32x128xf32>
    %c211 = arith.constant 211 : index
    %c0_19 = arith.constant 0 : index
    %68 = vector.load %arg0[%c211, %c0_19] : memref<224x128xf32, #tpu.memory_space<vmem>>, vector<1x128xf32>
    %cst_20 = arith.constant dense<0.000000e+00> : vector<8x128xf32>
    %69 = tpu.matmul %66, %67, %cst_20 {dimension_numbers = #tpu.dot_dimension_numbers<[1], [0], [0], [1], [0, 0, 1, 1], [], []>} : vector<8x32xf32>, vector<32x128xf32>, vector<8x128xf32> -> vector<8x128xf32>
    %70 = vector.broadcast %68 : vector<1x128xf32> to vector<8x128xf32>
    %71 = arith.addf %69, %70 : vector<8x128xf32>
    %72 = vector.extract_strided_slice %71 {offsets = [0, 0], sizes = [8, 5], strides = [1, 1]} : vector<8x128xf32> to vector<8x5xf32>
    %73 = vector.extract_strided_slice %71 {offsets = [0, 5], sizes = [8, 1], strides = [1, 1]} : vector<8x128xf32> to vector<8x1xf32>
    %cst_21 = arith.constant dense<0xFF800000> : vector<8xf32>
    %74 = vector.multi_reduction <maximumf>, %72, %cst_21 [1] : vector<8x5xf32> to vector<8xf32>
    %75 = vector.shape_cast %74 : vector<8xf32> to vector<8x1xf32>
    %76 = vector.broadcast %75 : vector<8x1xf32> to vector<8x5xf32>
    %77 = arith.subf %72, %76 : vector<8x5xf32>
    %78 = math.exp %77 : vector<8x5xf32>
    %cst_22 = arith.constant dense<0.000000e+00> : vector<8xf32>
    %79 = vector.multi_reduction <add>, %78, %cst_22 [1] : vector<8x5xf32> to vector<8xf32>
    %80 = vector.shape_cast %79 : vector<8xf32> to vector<8x1xf32>
    %81 = math.log %80 : vector<8x1xf32>
    %82 = vector.broadcast %81 : vector<8x1xf32> to vector<8x5xf32>
    %83 = arith.subf %77, %82 : vector<8x5xf32>
    %cst_23 = arith.constant 0.000000e+00 : f32
    %84 = vector.broadcast %cst_23 : f32 to vector<8x58xf32>
    %85 = tpu.concatenate %66, %64, %83, %73, %84 in 1 : vector<8x32xf32>, vector<8x32xf32>, vector<8x5xf32>, vector<8x1xf32>, vector<8x58xf32> -> vector<8x128xf32>
    %c0_24 = arith.constant 0 : index
    %c0_25 = arith.constant 0 : index
    %86 = vector.load %arg2[%c0_24, %c0_25] : memref<8x128xf32, #tpu.memory_space<vmem>>, vector<8x128xf32>
    tpu.vector_store %arg2[%c0_24, %c0_25], %85 {strides = array<i32>} : memref<8x128xf32, #tpu.memory_space<vmem>>, vector<8x128xf32>,
    return
  }
}

</mosaic_0001>

<llo_original>
// kernel: tpu_custom_call.1
$region0: #{tpu_custom_call.1}
  #allocation0 [shape = 'u32[]', space=smem, size = 0x4, offset = 0x4, fixed_abs, tag = 'smem constant byte address 0x4 - core index']
  #allocation1 [shape = 'u32[144,128]{1,0:T(1,128)}', space=vmem, size = 0x12000, scoped, tag = 'internal scratch']
  %s0 = inlined_call_operand.hbm [shape: f32[224,128], index: 0, kind: input, shape index: {}]
  %s1 = inlined_call_operand.hbm [shape: f32[8,128], index: 1, kind: input, shape index: {}]
  %s2 = inlined_call_operand.hbm [shape: f32[8,128], index: 2, kind: output, shape index: {}]
  %s3 = sld [smem:[#allocation0]]
  $region26: #{tpu_custom_call.1} parent=0
    _
  %s5 = ssub.s32 1, %s3
  %s6 = scalar_select 0, %s5, %s3
  $region1: #{tpu_custom_call.1} parent=0
    #allocation2 [shape = 'u8[114688]{0}', space=vmem, size = 0x1c000, scoped, tag = 'input window, operand 0, single buffered']
    #allocation3 [shape = 's32[1]{0}', space=sflag, size = 0x4, scoped, tag = 'scoped memory for tpu_custom_call.1']
    #allocation4 [shape = 's32[1]{0}', space=sflag, size = 0x4, scoped, tag = 'scoped memory for tpu_custom_call.1']
    #allocation5 [shape = 'u8[4096]{0}', space=vmem, size = 0x1000, scoped, tag = 'input window, operand 1, single buffered']
    #allocation6 [shape = 's32[1]{0}', space=sflag, size = 0x4, scoped, tag = 'scoped memory for tpu_custom_call.1']
    #allocation7 [shape = 'u8[4096]{0}', space=vmem, size = 0x1000, scoped, tag = 'output window, operand 0, single buffered']
    %7 = vsyncpa [#allocation3], 0
    %8 = vsyncpa [#allocation6], 0
    %9 = vsyncpa [#allocation4], 0
    // Predicated region
    $region2: #{tpu_custom_call.1} parent=1 // pred_check
      _
    $region3: #{tpu_custom_call.1} parent=1 // pred_check_branch
      %11 = sbr.rel (0) target = $region5
    $region4: #{tpu_custom_call.1} parent=1 // pred_region
      %s13 = ssub.s32 3584, 3584
      %14 = vsyncadd [#allocation3], %s13
      %s15 = sshll.u32 [#allocation2], 4
      %s16 = int_to_ptr.vmem [resolvable:$true] %s15
      %21 = dma.hbm_to_vmem [thread:$0]  %s0, 3584, %s16, [#allocation3], 128, 128, 8
    $region5: #{tpu_custom_call.1} parent=1 // pred_fallthru
      _
    // Predicated region
    $region6: #{tpu_custom_call.1} parent=1 // pred_check
      _
    $region7: #{tpu_custom_call.1} parent=1 // pred_check_branch
      %23 = sbr.rel (0) target = $region9
    $region8: #{tpu_custom_call.1} parent=1 // pred_region
      %s25 = ssub.s32 128, 128
      %26 = vsyncadd [#allocation6], %s25
      %s28 = sshll.u32 [#allocation5], 4
      %s29 = int_to_ptr.vmem [resolvable:$true] %s28
      %31 = dma.hbm_to_vmem [thread:$0]  %s1, 128, %s29, [#allocation6]
    $region9: #{tpu_custom_call.1} parent=1 // pred_fallthru
      _
    // Predicated region
    $region10: #{tpu_custom_call.1} parent=1 // pred_check
      _
    $region11: #{tpu_custom_call.1} parent=1 // pred_check_branch
      %33 = sbr.rel (0) target = $region13
    $region12: #{tpu_custom_call.1} parent=1 // pred_region
      %34 = dma.done [#allocation3], 3584
    $region13: #{tpu_custom_call.1} parent=1 // pred_fallthru
      _
    // Predicated region
    $region14: #{tpu_custom_call.1} parent=1 // pred_check
      _
    $region15: #{tpu_custom_call.1} parent=1 // pred_check_branch
      %36 = sbr.rel (0) target = $region17
    $region16: #{tpu_custom_call.1} parent=1 // pred_region
      %37 = dma.done [#allocation6], 128
    $region17: #{tpu_custom_call.1} parent=1 // pred_fallthru
      _
    %v38 = vld [vmem:[#allocation5] sm:$0xff]
    %v39 = vld [vmem:[#allocation2] sm:$0xff]
    %v40 = vld [vmem:[#allocation2 + $0x8] sm:$0xff]
    %v41 = vld [vmem:[#allocation2 + $0x10] sm:$0xff]
    %v42 = vld [vmem:[#allocation2 + $0x18] sm:$0xff]
    %v43 = vld [vmem:[#allocation2 + $0x20] sm:$0xff]
    %v44 = vld [vmem:[#allocation2 + $0x28] sm:$0xff]
    %v45 = vld [vmem:[#allocation2 + $0xd0] sm:$0x1]
    %v46 = vlaneseq
    %v47 = vshrl.u32 %v46, 7
    %v48 = vsub.s32 0, %v47
    %v49 = vrot.slane %v45, %v48
    %vm50 = vcmask 392192
    %v52 = vsel %vm50, %v38, 0
    %54 = vmatprep.subr.mxu0 0.0
    %55 = vmatpush1.msra.mxu0 %v39
    %56 = vmatprep.subr.mxu0 0.0
    %57 = vmatpush1.msra.mxu0 %v40
    %58 = vmatprep.subr.mxu0 0.0
    %59 = vmatpush1.msra.mxu0 %v41
    %60 = vmatprep.subr.mxu0 0.0
    %61 = vmatpush1.msra.mxu0 %v42
    %62 = vmatprep.subr.mxu0 0.0
    %63 = vmatpush1.msra.mxu0 %v43
    %64 = vmatprep.subr.mxu0 0.0
    %65 = vmatpush1.msra.mxu0 %v44
    %66 = vmatprep.subr.mxu0 0.0
    %67 = vmatpush1.msra.mxu0 0.0
    %68 = vmatprep.subr.mxu0 0.0
    %69 = vmatpush1.msra.mxu0 0.0
    %70 = vmatprep.subr.mxu0 0.0
    %71 = vmatpush1.msra.mxu0 0.0
    %72 = vmatprep.subr.mxu0 0.0
    %73 = vmatpush1.msra.mxu0 0.0
    %74 = vmatprep.subr.mxu0 0.0
    %75 = vmatpush1.msra.mxu0 0.0
    %76 = vmatprep.subr.mxu0 0.0
    %77 = vmatpush1.msra.mxu0 0.0
    %78 = vmatprep.subr.mxu0 0.0
    %79 = vmatpush1.msra.mxu0 0.0
    %80 = vmatprep.subr.mxu0 0.0
    %81 = vmatpush1.msra.mxu0 0.0
    %82 = vmatprep.subr.mxu0 0.0
    %83 = vmatpush1.msra.mxu0 0.0
    %84 = vmatprep.subr.mxu0 0.0
    %85 = vmatpush1.msra.mxu0 0.0
    %86 = vmatprep.subr.mxu0 0.0
    %87 = vmatpush1.msra.mxu0 0.0
    %88 = vmatprep.subr.mxu0 0.0
    %89 = vmatpush1.msra.mxu0 0.0
    %90 = vmatprep.subr.mxu0 0.0
    %91 = vmatpush1.msra.mxu0 0.0
    %92 = vmatprep.subr.mxu0 0.0
    %93 = vmatpush1.msra.mxu0 0.0
    %94 = vmatprep.subr.mxu0 0.0
    %95 = vmatpush1.msra.mxu0 0.0
    %96 = vmatprep.subr.mxu0 0.0
    %97 = vmatpush1.msra.mxu0 0.0
    %98 = vmatprep.subr.mxu0 0.0
    %99 = vmatpush1.msra.mxu0 0.0
    %100 = vmatprep.subr.mxu0 0.0
    %101 = vmatpush1.msra.mxu0 0.0
    %102 = vmatprep.subr.mxu0 0.0
    %103 = vmatpush1.msra.mxu0 0.0
    %104 = vmatprep.subr.mxu0 0.0
    %105 = vmatpush1.msra.mxu0 0.0
    %106 = vmatprep.subr.mxu0 0.0
    %107 = vmatpush1.msra.mxu0 0.0
    %108 = vmatprep.subr.mxu0 0.0
    %109 = vmatpush1.msra.mxu0 0.0
    %110 = vmatprep.subr.mxu0 0.0
    %111 = vmatpush1.msra.mxu0 0.0
    %112 = vmatprep.subr.mxu0 0.0
    %113 = vmatpush1.msra.mxu0 0.0
    %114 = vmatprep.subr.mxu0 0.0
    %115 = vmatpush1.msra.mxu0 0.0
    %116 = vmatprep.subr.mxu0 0.0
    %117 = vmatpush1.msra.mxu0 0.0
    %118 = vmatprep.mubr.f32.mxu0 0.0
    %119 = vmatmul.mubr.f32.gmra.mrb[0].mxu0 %v52
    %v120 = vpop.f32.mrb[0].mxu0
    %v121 = vadd.f32 %v49, %v120
    %v122 = vpop.f32.mrb[0].mxu0
    %123 = vdwg.mxu0
    %v124 = vxor.u32 %v121, 2147483648
    %v125 = vmul.f32 %v124, 1.442695
    %v126 = vpow.pop %v125
    %v127 = vadd.f32 %v126, 1.0
    %v128 = vrcp.pop %v127
    %v129 = vmul.f32 1.0, %v128
    %v130 = vtanh.pop %v121
    %131 = vrot.lane.b32.xlu0 %v38, 112
    %v132 = vpop.permute.xlu0 %131
    %v134 = vmul.f32 %v129, %v132
    %136 = vrot.lane.b32.xlu0 %v130, 64
    %v137 = vpop.permute.xlu0 %136
    %v139 = vmul.f32 %v129, %v137
    %141 = vrot.lane.b32.xlu0 %v139, 32
    %v142 = vpop.permute.xlu0 %141
    %v144 = vadd.f32 %v134, %v142
    %v145 = vtanh.pop %v144
    %147 = vrot.lane.b32.xlu0 %v145, 64
    %v148 = vpop.permute.xlu0 %147
    %v150 = vmul.f32 %v129, %v148
    %v151 = vld [vmem:[#allocation2 + $0xd8] sm:$0xff]
    %153 = vrot.lane.b32.xlu0 %v150, 32
    %v154 = vpop.permute.xlu0 %153
    %vm156 = vcmask 64512
    %v158 = vsel %vm156, %v151, 0
    %160 = vmatprep.subr.mxu0 0.0
    %161 = vmatpush1.msra.mxu0 %v154
    %162 = vmatprep.subr.mxu0 0.0
    %163 = vmatpush1.msra.mxu0 0.0
    %164 = vmatprep.subr.mxu0 0.0
    %165 = vmatpush1.msra.mxu0 0.0
    %166 = vmatprep.subr.mxu0 0.0
    %167 = vmatpush1.msra.mxu0 0.0
    %168 = vmatprep.subr.mxu0 0.0
    %169 = vmatpush1.msra.mxu0 0.0
    %170 = vmatprep.subr.mxu0 0.0
    %171 = vmatpush1.msra.mxu0 0.0
    %172 = vmatprep.subr.mxu0 0.0
    %173 = vmatpush1.msra.mxu0 0.0
    %174 = vmatprep.subr.mxu0 0.0
    %175 = vmatpush1.msra.mxu0 0.0
    %176 = vmatprep.subr.mxu0 0.0
    %177 = vmatpush1.msra.mxu0 0.0
    %178 = vmatprep.subr.mxu0 0.0
    %179 = vmatpush1.msra.mxu0 0.0
    %180 = vmatprep.subr.mxu0 0.0
    %181 = vmatpush1.msra.mxu0 0.0
    %182 = vmatprep.subr.mxu0 0.0
    %183 = vmatpush1.msra.mxu0 0.0
    %184 = vmatprep.subr.mxu0 0.0
    %185 = vmatpush1.msra.mxu0 0.0
    %186 = vmatprep.subr.mxu0 0.0
    %187 = vmatpush1.msra.mxu0 0.0
    %188 = vmatprep.subr.mxu0 0.0
    %189 = vmatpush1.msra.mxu0 0.0
    %190 = vmatprep.subr.mxu0 0.0
    %191 = vmatpush1.msra.mxu0 0.0
    %192 = vmatprep.subr.mxu0 0.0
    %193 = vmatpush1.msra.mxu0 0.0
    %194 = vmatprep.subr.mxu0 0.0
    %195 = vmatpush1.msra.mxu0 0.0
    %196 = vmatprep.subr.mxu0 0.0
    %197 = vmatpush1.msra.mxu0 0.0
    %198 = vmatprep.subr.mxu0 0.0
    %199 = vmatpush1.msra.mxu0 0.0
    %200 = vmatprep.subr.mxu0 0.0
    %201 = vmatpush1.msra.mxu0 0.0
    %202 = vmatprep.subr.mxu0 0.0
    %203 = vmatpush1.msra.mxu0 0.0
    %204 = vmatprep.subr.mxu0 0.0
    %205 = vmatpush1.msra.mxu0 0.0
    %206 = vmatprep.subr.mxu0 0.0
    %207 = vmatpush1.msra.mxu0 0.0
    %208 = vmatprep.subr.mxu0 0.0
    %209 = vmatpush1.msra.mxu0 0.0
    %210 = vmatprep.subr.mxu0 0.0
    %211 = vmatpush1.msra.mxu0 0.0
    %212 = vmatprep.subr.mxu0 0.0
    %213 = vmatpush1.msra.mxu0 0.0
    %214 = vmatprep.subr.mxu0 0.0
    %215 = vmatpush1.msra.mxu0 0.0
    %216 = vmatprep.subr.mxu0 0.0
    %217 = vmatpush1.msra.mxu0 0.0
    %218 = vmatprep.subr.mxu0 0.0
    %219 = vmatpush1.msra.mxu0 0.0
    %220 = vmatprep.subr.mxu0 0.0
    %221 = vmatpush1.msra.mxu0 0.0
    %222 = vmatprep.subr.mxu0 0.0
    %223 = vmatpush1.msra.mxu0 0.0
    %224 = vmatprep.mubr.f32.mxu0 0.0
    %225 = vmatmul.mubr.f32.gmra.mrb[0].mxu0 %v158
    %v226 = vpop.f32.mrb[0].mxu0
    %v227 = vadd.f32 0.0, %v226
    %v228 = vpop.f32.mrb[0].mxu0
    %229 = vdwg.mxu0
    %231 = vrot.lane.b32.xlu0 %v227, 32
    %v232 = vpop.permute.xlu0 %231
    %vm234 = vcmask 261120
    %v235 = vsel %vm234, %v154, %v232
    %v236 = vld [vmem:[#allocation2 + $0x30] sm:$0xff]
    %v237 = vld [vmem:[#allocation2 + $0x38] sm:$0xff]
    %v238 = vld [vmem:[#allocation2 + $0x40] sm:$0xff]
    %v239 = vld [vmem:[#allocation2 + $0x48] sm:$0xff]
    %v240 = vld [vmem:[#allocation2 + $0x50] sm:$0xff]
    %v241 = vld [vmem:[#allocation2 + $0x58] sm:$0xff]
    %v242 = vld [vmem:[#allocation2 + $0x60] sm:$0xff]
    %v243 = vld [vmem:[#allocation2 + $0x68] sm:$0xff]
    %v244 = vld [vmem:[#allocation2 + $0xd1] sm:$0x1]
    %v245 = vlaneseq
    %v246 = vshrl.u32 %v245, 7
    %v247 = vsub.s32 0, %v246
    %v248 = vrot.slane %v244, %v247
    %vm249 = vcmask 523264
    %v251 = vsel %vm249, %v235, 0
    %253 = vmatprep.subr.mxu0 0.0
    %254 = vmatpush1.msra.mxu0 %v236
    %255 = vmatprep.subr.mxu0 0.0
    %256 = vmatpush1.msra.mxu0 %v237
    %257 = vmatprep.subr.mxu0 0.0
    %258 = vmatpush1.msra.mxu0 %v238
    %259 = vmatprep.subr.mxu0 0.0
    %260 = vmatpush1.msra.mxu0 %v239
    %261 = vmatprep.subr.mxu0 0.0
    %262 = vmatpush1.msra.mxu0 %v240
    %263 = vmatprep.subr.mxu0 0.0
    %264 = vmatpush1.msra.mxu0 %v241
    %265 = vmatprep.subr.mxu0 0.0
    %266 = vmatpush1.msra.mxu0 %v242
    %267 = vmatprep.subr.mxu0 0.0
    %268 = vmatpush1.msra.mxu0 %v243
    %269 = vmatprep.subr.mxu0 0.0
    %270 = vmatpush1.msra.mxu0 0.0
    %271 = vmatprep.subr.mxu0 0.0
    %272 = vmatpush1.msra.mxu0 0.0
    %273 = vmatprep.subr.mxu0 0.0
    %274 = vmatpush1.msra.mxu0 0.0
    %275 = vmatprep.subr.mxu0 0.0
    %276 = vmatpush1.msra.mxu0 0.0
    %277 = vmatprep.subr.mxu0 0.0
    %278 = vmatpush1.msra.mxu0 0.0
    %279 = vmatprep.subr.mxu0 0.0
    %280 = vmatpush1.msra.mxu0 0.0
    %281 = vmatprep.subr.mxu0 0.0
    %282 = vmatpush1.msra.mxu0 0.0
    %283 = vmatprep.subr.mxu0 0.0
    %284 = vmatpush1.msra.mxu0 0.0
    %285 = vmatprep.subr.mxu0 0.0
    %286 = vmatpush1.msra.mxu0 0.0
    %287 = vmatprep.subr.mxu0 0.0
    %288 = vmatpush1.msra.mxu0 0.0
    %289 = vmatprep.subr.mxu0 0.0
    %290 = vmatpush1.msra.mxu0 0.0
    %291 = vmatprep.subr.mxu0 0.0
    %292 = vmatpush1.msra.mxu0 0.0
    %293 = vmatprep.subr.mxu0 0.0
    %294 = vmatpush1.msra.mxu0 0.0
    %295 = vmatprep.subr.mxu0 0.0
    %296 = vmatpush1.msra.mxu0 0.0
    %297 = vmatprep.subr.mxu0 0.0
    %298 = vmatpush1.msra.mxu0 0.0
    %299 = vmatprep.subr.mxu0 0.0
    %300 = vmatpush1.msra.mxu0 0.0
    %301 = vmatprep.subr.mxu0 0.0
    %302 = vmatpush1.msra.mxu0 0.0
    %303 = vmatprep.subr.mxu0 0.0
    %304 = vmatpush1.msra.mxu0 0.0
    %305 = vmatprep.subr.mxu0 0.0
    %306 = vmatpush1.msra.mxu0 0.0
    %307 = vmatprep.subr.mxu0 0.0
    %308 = vmatpush1.msra.mxu0 0.0
    %309 = vmatprep.subr.mxu0 0.0
    %310 = vmatpush1.msra.mxu0 0.0
    %311 = vmatprep.subr.mxu0 0.0
    %312 = vmatpush1.msra.mxu0 0.0
    %313 = vmatprep.subr.mxu0 0.0
    %314 = vmatpush1.msra.mxu0 0.0
    %315 = vmatprep.subr.mxu0 0.0
    %316 = vmatpush1.msra.mxu0 0.0
    %317 = vmatprep.mubr.f32.mxu0 0.0
    %318 = vmatmul.mubr.f32.gmra.mrb[0].mxu0 %v251
    %v319 = vpop.f32.mrb[0].mxu0
    %v320 = vadd.f32 %v248, %v319
    %v321 = vpop.f32.mrb[0].mxu0
    %322 = vdwg.mxu0
    %v323 = vxor.u32 %v320, 2147483648
    %v324 = vmul.f32 %v323, 1.442695
    %v325 = vpow.pop %v324
    %v326 = vadd.f32 %v325, 1.0
    %v327 = vrcp.pop %v326
    %v328 = vmul.f32 1.0, %v327
    %v329 = vtanh.pop %v320
    %v330 = vmul.f32 %v328, %v144
    %332 = vrot.lane.b32.xlu0 %v329, 64
    %v333 = vpop.permute.xlu0 %332
    %v335 = vmul.f32 %v328, %v333
    %337 = vrot.lane.b32.xlu0 %v335, 32
    %v338 = vpop.permute.xlu0 %337
    %v340 = vadd.f32 %v330, %v338
    %v341 = vtanh.pop %v340
    %343 = vrot.lane.b32.xlu0 %v341, 64
    %v344 = vpop.permute.xlu0 %343
    %v346 = vmul.f32 %v328, %v344
    %348 = vrot.lane.b32.xlu0 %v346, 32
    %v349 = vpop.permute.xlu0 %348
    %351 = vmatprep.subr.mxu0 0.0
    %352 = vmatpush1.msra.mxu0 %v349
    %353 = vmatprep.subr.mxu0 0.0
    %354 = vmatpush1.msra.mxu0 0.0
    %355 = vmatprep.subr.mxu0 0.0
    %356 = vmatpush1.msra.mxu0 0.0
    %357 = vmatprep.subr.mxu0 0.0
    %358 = vmatpush1.msra.mxu0 0.0
    %359 = vmatprep.subr.mxu0 0.0
    %360 = vmatpush1.msra.mxu0 0.0
    %361 = vmatprep.subr.mxu0 0.0
    %362 = vmatpush1.msra.mxu0 0.0
    %363 = vmatprep.subr.mxu0 0.0
    %364 = vmatpush1.msra.mxu0 0.0
    %365 = vmatprep.subr.mxu0 0.0
    %366 = vmatpush1.msra.mxu0 0.0
    %367 = vmatprep.subr.mxu0 0.0
    %368 = vmatpush1.msra.mxu0 0.0
    %369 = vmatprep.subr.mxu0 0.0
    %370 = vmatpush1.msra.mxu0 0.0
    %371 = vmatprep.subr.mxu0 0.0
    %372 = vmatpush1.msra.mxu0 0.0
    %373 = vmatprep.subr.mxu0 0.0
    %374 = vmatpush1.msra.mxu0 0.0
    %375 = vmatprep.subr.mxu0 0.0
    %376 = vmatpush1.msra.mxu0 0.0
    %377 = vmatprep.subr.mxu0 0.0
    %378 = vmatpush1.msra.mxu0 0.0
    %379 = vmatprep.subr.mxu0 0.0
    %380 = vmatpush1.msra.mxu0 0.0
    %381 = vmatprep.subr.mxu0 0.0
    %382 = vmatpush1.msra.mxu0 0.0
    %383 = vmatprep.subr.mxu0 0.0
    %384 = vmatpush1.msra.mxu0 0.0
    %385 = vmatprep.subr.mxu0 0.0
    %386 = vmatpush1.msra.mxu0 0.0
    %387 = vmatprep.subr.mxu0 0.0
    %388 = vmatpush1.msra.mxu0 0.0
    %389 = vmatprep.subr.mxu0 0.0
    %390 = vmatpush1.msra.mxu0 0.0
    %391 = vmatprep.subr.mxu0 0.0
    %392 = vmatpush1.msra.mxu0 0.0
    %393 = vmatprep.subr.mxu0 0.0
    %394 = vmatpush1.msra.mxu0 0.0
    %395 = vmatprep.subr.mxu0 0.0
    %396 = vmatpush1.msra.mxu0 0.0
    %397 = vmatprep.subr.mxu0 0.0
    %398 = vmatpush1.msra.mxu0 0.0
    %399 = vmatprep.subr.mxu0 0.0
    %400 = vmatpush1.msra.mxu0 0.0
    %401 = vmatprep.subr.mxu0 0.0
    %402 = vmatpush1.msra.mxu0 0.0
    %403 = vmatprep.subr.mxu0 0.0
    %404 = vmatpush1.msra.mxu0 0.0
    %405 = vmatprep.subr.mxu0 0.0
    %406 = vmatpush1.msra.mxu0 0.0
    %407 = vmatprep.subr.mxu0 0.0
    %408 = vmatpush1.msra.mxu0 0.0
    %409 = vmatprep.subr.mxu0 0.0
    %410 = vmatpush1.msra.mxu0 0.0
    %411 = vmatprep.subr.mxu0 0.0
    %412 = vmatpush1.msra.mxu0 0.0
    %413 = vmatprep.subr.mxu0 0.0
    %414 = vmatpush1.msra.mxu0 0.0
    %415 = vmatprep.mubr.f32.mxu0 0.0
    %416 = vmatmul.mubr.f32.gmra.mrb[0].mxu0 %v158
    %v417 = vpop.f32.mrb[0].mxu0
    %v418 = vadd.f32 0.0, %v417
    %v419 = vpop.f32.mrb[0].mxu0
    %420 = vdwg.mxu0
    %422 = vrot.lane.b32.xlu0 %v418, 32
    %v423 = vpop.permute.xlu0 %422
    %v425 = vsel %vm234, %v349, %v423
    %v426 = vld [vmem:[#allocation2 + $0x70] sm:$0xff]
    %v427 = vld [vmem:[#allocation2 + $0x78] sm:$0xff]
    %v428 = vld [vmem:[#allocation2 + $0x80] sm:$0xff]
    %v429 = vld [vmem:[#allocation2 + $0x88] sm:$0xff]
    %v430 = vld [vmem:[#allocation2 + $0x90] sm:$0xff]
    %v431 = vld [vmem:[#allocation2 + $0x98] sm:$0xff]
    %v432 = vld [vmem:[#allocation2 + $0xa0] sm:$0xff]
    %v433 = vld [vmem:[#allocation2 + $0xa8] sm:$0xff]
    %v434 = vld [vmem:[#allocation2 + $0xd2] sm:$0x1]
    %v435 = vlaneseq
    %v436 = vshrl.u32 %v435, 7
    %v437 = vsub.s32 0, %v436
    %v438 = vrot.slane %v434, %v437
    %v440 = vsel %vm249, %v425, 0
    %442 = vmatprep.subr.mxu0 0.0
    %443 = vmatpush1.msra.mxu0 %v426
    %444 = vmatprep.subr.mxu0 0.0
    %445 = vmatpush1.msra.mxu0 %v427
    %446 = vmatprep.subr.mxu0 0.0
    %447 = vmatpush1.msra.mxu0 %v428
    %448 = vmatprep.subr.mxu0 0.0
    %449 = vmatpush1.msra.mxu0 %v429
    %450 = vmatprep.subr.mxu0 0.0
    %451 = vmatpush1.msra.mxu0 %v430
    %452 = vmatprep.subr.mxu0 0.0
    %453 = vmatpush1.msra.mxu0 %v431
    %454 = vmatprep.subr.mxu0 0.0
    %455 = vmatpush1.msra.mxu0 %v432
    %456 = vmatprep.subr.mxu0 0.0
    %457 = vmatpush1.msra.mxu0 %v433
    %458 = vmatprep.subr.mxu0 0.0
    %459 = vmatpush1.msra.mxu0 0.0
    %460 = vmatprep.subr.mxu0 0.0
    %461 = vmatpush1.msra.mxu0 0.0
    %462 = vmatprep.subr.mxu0 0.0
    %463 = vmatpush1.msra.mxu0 0.0
    %464 = vmatprep.subr.mxu0 0.0
    %465 = vmatpush1.msra.mxu0 0.0
    %466 = vmatprep.subr.mxu0 0.0
    %467 = vmatpush1.msra.mxu0 0.0
    %468 = vmatprep.subr.mxu0 0.0
    %469 = vmatpush1.msra.mxu0 0.0
    %470 = vmatprep.subr.mxu0 0.0
    %471 = vmatpush1.msra.mxu0 0.0
    %472 = vmatprep.subr.mxu0 0.0
    %473 = vmatpush1.msra.mxu0 0.0
    %474 = vmatprep.subr.mxu0 0.0
    %475 = vmatpush1.msra.mxu0 0.0
    %476 = vmatprep.subr.mxu0 0.0
    %477 = vmatpush1.msra.mxu0 0.0
    %478 = vmatprep.subr.mxu0 0.0
    %479 = vmatpush1.msra.mxu0 0.0
    %480 = vmatprep.subr.mxu0 0.0
    %481 = vmatpush1.msra.mxu0 0.0
    %482 = vmatprep.subr.mxu0 0.0
    %483 = vmatpush1.msra.mxu0 0.0
    %484 = vmatprep.subr.mxu0 0.0
    %485 = vmatpush1.msra.mxu0 0.0
    %486 = vmatprep.subr.mxu0 0.0
    %487 = vmatpush1.msra.mxu0 0.0
    %488 = vmatprep.subr.mxu0 0.0
    %489 = vmatpush1.msra.mxu0 0.0
    %490 = vmatprep.subr.mxu0 0.0
    %491 = vmatpush1.msra.mxu0 0.0
    %492 = vmatprep.subr.mxu0 0.0
    %493 = vmatpush1.msra.mxu0 0.0
    %494 = vmatprep.subr.mxu0 0.0
    %495 = vmatpush1.msra.mxu0 0.0
    %496 = vmatprep.subr.mxu0 0.0
    %497 = vmatpush1.msra.mxu0 0.0
    %498 = vmatprep.subr.mxu0 0.0
    %499 = vmatpush1.msra.mxu0 0.0
    %500 = vmatprep.subr.mxu0 0.0
    %501 = vmatpush1.msra.mxu0 0.0
    %502 = vmatprep.subr.mxu0 0.0
    %503 = vmatpush1.msra.mxu0 0.0
    %504 = vmatprep.subr.mxu0 0.0
    %505 = vmatpush1.msra.mxu0 0.0
    %506 = vmatprep.mubr.f32.mxu0 0.0
    %507 = vmatmul.mubr.f32.gmra.mrb[0].mxu0 %v440
    %v508 = vpop.f32.mrb[0].mxu0
    %v509 = vadd.f32 %v438, %v508
    %v510 = vpop.f32.mrb[0].mxu0
    %511 = vdwg.mxu0
    %v512 = vxor.u32 %v509, 2147483648
    %v513 = vmul.f32 %v512, 1.442695
    %v514 = vpow.pop %v513
    %v515 = vadd.f32 %v514, 1.0
    %v516 = vrcp.pop %v515
    %v517 = vmul.f32 1.0, %v516
    %v518 = vtanh.pop %v509
    %v519 = vmul.f32 %v517, %v340
    %521 = vrot.lane.b32.xlu0 %v518, 64
    %v522 = vpop.permute.xlu0 %521
    %v524 = vmul.f32 %v517, %v522
    %526 = vrot.lane.b32.xlu0 %v524, 32
    %v527 = vpop.permute.xlu0 %526
    %v529 = vadd.f32 %v519, %v527
    %v530 = vtanh.pop %v529
    %532 = vrot.lane.b32.xlu0 %v530, 64
    %v533 = vpop.permute.xlu0 %532
    %v535 = vmul.f32 %v517, %v533
    %v536 = vld [vmem:[#allocation2 + $0xb0] sm:$0xff]
    %v537 = vld [vmem:[#allocation2 + $0xb8] sm:$0xff]
    %v538 = vld [vmem:[#allocation2 + $0xc0] sm:$0xff]
    %v539 = vld [vmem:[#allocation2 + $0xc8] sm:$0xff]
    %v540 = vld [vmem:[#allocation2 + $0xd3] sm:$0x1]
    %v541 = vlaneseq
    %v542 = vshrl.u32 %v541, 7
    %v543 = vsub.s32 0, %v542
    %v544 = vrot.slane %v540, %v543
    %546 = vrot.lane.b32.xlu0 %v535, 32
    %v547 = vpop.permute.xlu0 %546
    %v548 = vsel %vm234, %v547, 0
    %550 = vmatprep.subr.mxu0 0.0
    %551 = vmatpush1.msra.mxu0 %v536
    %552 = vmatprep.subr.mxu0 0.0
    %553 = vmatpush1.msra.mxu0 %v537
    %554 = vmatprep.subr.mxu0 0.0
    %555 = vmatpush1.msra.mxu0 %v538
    %556 = vmatprep.subr.mxu0 0.0
    %557 = vmatpush1.msra.mxu0 %v539
    %558 = vmatprep.subr.mxu0 0.0
    %559 = vmatpush1.msra.mxu0 0.0
    %560 = vmatprep.subr.mxu0 0.0
    %561 = vmatpush1.msra.mxu0 0.0
    %562 = vmatprep.subr.mxu0 0.0
    %563 = vmatpush1.msra.mxu0 0.0
    %564 = vmatprep.subr.mxu0 0.0
    %565 = vmatpush1.msra.mxu0 0.0
    %566 = vmatprep.subr.mxu0 0.0
    %567 = vmatpush1.msra.mxu0 0.0
    %568 = vmatprep.subr.mxu0 0.0
    %569 = vmatpush1.msra.mxu0 0.0
    %570 = vmatprep.subr.mxu0 0.0
    %571 = vmatpush1.msra.mxu0 0.0
    %572 = vmatprep.subr.mxu0 0.0
    %573 = vmatpush1.msra.mxu0 0.0
    %574 = vmatprep.subr.mxu0 0.0
    %575 = vmatpush1.msra.mxu0 0.0
    %576 = vmatprep.subr.mxu0 0.0
    %577 = vmatpush1.msra.mxu0 0.0
    %578 = vmatprep.subr.mxu0 0.0
    %579 = vmatpush1.msra.mxu0 0.0
    %580 = vmatprep.subr.mxu0 0.0
    %581 = vmatpush1.msra.mxu0 0.0
    %582 = vmatprep.subr.mxu0 0.0
    %583 = vmatpush1.msra.mxu0 0.0
    %584 = vmatprep.subr.mxu0 0.0
    %585 = vmatpush1.msra.mxu0 0.0
    %586 = vmatprep.subr.mxu0 0.0
    %587 = vmatpush1.msra.mxu0 0.0
    %588 = vmatprep.subr.mxu0 0.0
    %589 = vmatpush1.msra.mxu0 0.0
    %590 = vmatprep.subr.mxu0 0.0
    %591 = vmatpush1.msra.mxu0 0.0
    %592 = vmatprep.subr.mxu0 0.0
    %593 = vmatpush1.msra.mxu0 0.0
    %594 = vmatprep.subr.mxu0 0.0
    %595 = vmatpush1.msra.mxu0 0.0
    %596 = vmatprep.subr.mxu0 0.0
    %597 = vmatpush1.msra.mxu0 0.0
    %598 = vmatprep.subr.mxu0 0.0
    %599 = vmatpush1.msra.mxu0 0.0
    %600 = vmatprep.subr.mxu0 0.0
    %601 = vmatpush1.msra.mxu0 0.0
    %602 = vmatprep.subr.mxu0 0.0
    %603 = vmatpush1.msra.mxu0 0.0
    %604 = vmatprep.subr.mxu0 0.0
    %605 = vmatpush1.msra.mxu0 0.0
    %606 = vmatprep.subr.mxu0 0.0
    %607 = vmatpush1.msra.mxu0 0.0
    %608 = vmatprep.subr.mxu0 0.0
    %609 = vmatpush1.msra.mxu0 0.0
    %610 = vmatprep.subr.mxu0 0.0
    %611 = vmatpush1.msra.mxu0 0.0
    %612 = vmatprep.subr.mxu0 0.0
    %613 = vmatpush1.msra.mxu0 0.0
    %614 = vmatprep.mubr.f32.mxu0 0.0
    %615 = vmatmul.mubr.f32.gmra.mrb[0].mxu0 %v548
    %v616 = vpop.f32.mrb[0].mxu0
    %v617 = vadd.f32 %v544, %v616
    %v618 = vpop.f32.mrb[0].mxu0
    %619 = vdwg.mxu0
    %vm620 = vcmask 39936
    %v621 = vsel %vm620, %v617, -inf
    %622 = vmax.xlane.f32.xlu0 %v621
    %v623 = vpop.xlane.xlu0 %622
    %v624 = vsub.f32 %v617, %v623
    %v625 = vmul.f32 %v624, 1.442695
    %v626 = vpow.pop %v625
    %v627 = vsel %vm620, %v626, 0.0
    %628 = vadd.xlane.f32.xlu0 %v627
    %v629 = vpop.xlane.xlu0 %628
    %v630 = vlog2.pop %v629
    %v631 = vmul.f32 %v630, 0.6931472
    %v632 = vsub.f32 %v624, %v631
    %635 = vrot.lane.b32.xlu0 %v632, 64
    %v636 = vpop.permute.xlu0 %635
    %639 = vrot.lane.b32.xlu0 %v617, 64
    %v640 = vpop.permute.xlu0 %639
    %v642 = vsel %vm234, %v547, %v529
    %v643 = vsel %vm249, %v642, %v636
    %vm644 = vcmask 564224
    %v645 = vsel %vm644, %v643, %v640
    %vm646 = vcmask 572416
    %v647 = vsel %vm646, %v645, 0.0
    %648 = vst [vmem:[#allocation7] sm:$0xff] %v647
    // Predicated region
    $region18: #{tpu_custom_call.1} parent=1 // pred_check
      _
    $region19: #{tpu_custom_call.1} parent=1 // pred_check_branch
      %650 = sbr.rel (0) target = $region21
    $region20: #{tpu_custom_call.1} parent=1 // pred_region
      %s652 = ssub.s32 128, 128
      %653 = vsyncadd [#allocation4], %s652
      %s655 = sshll.u32 [#allocation7], 4
      %s656 = int_to_ptr.vmem [resolvable:$true] %s655
      %658 = dma.vmem_to_hbm [thread:$0]  %s656, 128, %s2, [#allocation4]
    $region21: #{tpu_custom_call.1} parent=1 // pred_fallthru
      _
    // Predicated region
    $region22: #{tpu_custom_call.1} parent=1 // pred_check
      _
    $region23: #{tpu_custom_call.1} parent=1 // pred_check_branch
      %660 = sbr.rel (0) target = $region25
    $region24: #{tpu_custom_call.1} parent=1 // pred_region
      %661 = dma.done [#allocation4], 128
    $region25: #{tpu_custom_call.1} parent=1 // pred_fallthru
      _
    %662 = vsyncpa [#allocation3], 1
    %663 = vsyncpa [#allocation6], 1
    %664 = vsyncpa [#allocation4], 1

</llo_original>
